<compile_context>
chip_gen: v5e
topology: v5e:2x2
jax: 0.10.0
libtpu: 0.0.40
codegen_flags: <defaults>
</compile_context>

<pallas_src>
from functools import partial

import jax
import jax.numpy as jnp
import numpy as np
from jax.experimental import pallas as pl
from jax.experimental.pallas import tpu as pltpu


def autopad(k, p=None):
    if p is None:
        p = k // 2 if isinstance(k, int) else [x // 2 for x in k]
    return p


def classify_kernel(x_ref, wt_ref, b_ref, o_ref, acc_ref, *, inv_hw):
    # x_ref  : (Nb, c1, Thw) VMEM block (spatial chunk of Nb images)
    # wt_ref : (c1, c2)      VMEM conv weight (center tap, transposed to [in, out])
    # b_ref  : (1, c2)       VMEM conv bias
    # o_ref  : (Nb, 1, c2)   VMEM output block (resident across the reduction axis)
    # acc_ref: (Nb, c1) f32  scratch: running spatial sum, persists across j
    j = pl.program_id(1)

    @pl.when(j == 0)
    def _init():
        acc_ref[...] = jnp.zeros_like(acc_ref)

    # Fused single-pass partial global-average-pool over this spatial chunk
    # (lane-direction reduce on the XLU; x is read exactly once).
    acc_ref[...] += jnp.sum(x_ref[...].astype(jnp.float32), axis=-1)

    @pl.when(j == pl.num_programs(1) - 1)
    def _finalize():
        z = acc_ref[...] * inv_hw                                    # (Nb, c1)
        y = jnp.dot(z, wt_ref[...].astype(jnp.float32),
                    preferred_element_type=jnp.float32)              # MXU matmul
        o_ref[...] = (y + b_ref[...]).astype(o_ref.dtype)[:, None, :]


def classify_forward(x, w, b, k=1, s=1, p=None, g=1, *,
                     vmem_budget_bytes=8 << 20):
    """x: (N, c1, H, W); w: (c2, c1, k, k) conv weight; b: (c2,) conv bias."""
    if g != 1:
        raise NotImplementedError("groups > 1")  # TODO(synk): grouped 1x1 conv path
    if p is not None and p != autopad(k):
        raise NotImplementedError("non-default padding")
    # TODO(synk): list-of-tensors input (channel concat of pooled features) is not
    # handled here; the wrapper takes a single NCHW tensor.

    N, c1, H, W = x.shape
    c2 = w.shape[0]
    HW = H * W

    # After global pooling the conv sees a 1x1 map; with autopad only the center
    # tap of an odd kxk kernel touches it -> the conv reduces to a dense layer.
    wt = jnp.asarray(w)[:, :, k // 2, k // 2].T.astype(jnp.float32)   # (c1, c2)
    b2 = jnp.asarray(b).reshape(1, c2).astype(jnp.float32)            # (1, c2)
    xr = x.reshape(N, c1, HW)                                         # lane-dense

    # --- choose Nb (batch elements per block) and Thw (spatial chunk) so that the
    # double-buffered input block stays within a conservative VMEM budget. ---
    per_img = c1 * HW * 4
    nb = max(1, min(N, vmem_budget_bytes // (2 * per_img)))
    if N >= 2:
        nb = min(nb, max(1, N // 2))   # keep >= 2 parallel grid steps for 2-TC chips
    while N % nb:
        nb -= 1

    thw = HW
    if 2 * nb * c1 * thw * 4 > vmem_budget_bytes:
        # Tile the spatial reduction axis: largest multiple-of-128 divisor of HW
        # that fits the budget; fall back to the full extent if none exists.
        t = (HW // 128) * 128
        while t >= 128:
            if HW % t == 0 and 2 * nb * c1 * t * 4 <= vmem_budget_bytes:
                thw = t
                break
            t -= 128

    grid = (N // nb, HW // thw)
    kernel = partial(classify_kernel, inv_hw=1.0 / float(HW))

    out = pl.pallas_call(
        kernel,
        out_shape=jax.ShapeDtypeStruct((N, 1, c2), x.dtype),
        grid_spec=pltpu.PrefetchScalarGridSpec(
            num_scalar_prefetch=0,
            grid=grid,
            in_specs=[
                pl.BlockSpec((nb, c1, thw), lambda i, j: (i, 0, j)),
                pl.BlockSpec((c1, c2), lambda i, j: (0, 0)),
                pl.BlockSpec((1, c2), lambda i, j: (0, 0)),
            ],
            out_specs=pl.BlockSpec((nb, 1, c2), lambda i, j: (i, 0, 0)),
            scratch_shapes=[pltpu.VMEM((nb, c1), jnp.float32)],
        ),
        compiler_params=pltpu.CompilerParams(
            dimension_semantics=("parallel", "arbitrary")),
    )(xr, wt, b2)
    return out.reshape(N, c2)


def classify_reference(x, w, b, k=1, s=1, p=None):
    """Pure-JAX reference mirroring the PyTorch forward."""
    pad = autopad(k, p)
    z = jnp.mean(x, axis=(2, 3), keepdims=True)               # AdaptiveAvgPool2d(1)
    y = jax.lax.conv_general_dilated(
        z, w, window_strides=(s, s), padding=[(pad, pad), (pad, pad)],
        dimension_numbers=("NCHW", "OIHW", "NCHW"))
    y = y + b.reshape(1, -1, 1, 1)
    return y.reshape(y.shape[0], -1)                           # Flatten


if __name__ == "__main__":
    k = 1
    N, c1, c2, H, W = 2, 16, 8, 16, 16

    key = jax.random.PRNGKey(0)
    kx, kw, kb = jax.random.split(key, 3)

    x = jax.random.normal(kx, (N, c1, H, W), dtype=jnp.float32)

    # Conv2d(c1, c2, k=1) parameters: deterministic kaiming-uniform-style init.
    fan_in = c1 * k * k
    bound = 1.0 / float(np.sqrt(fan_in))
    w = jax.random.uniform(kw, (c2, c1, k, k), minval=-bound, maxval=bound,
                           dtype=jnp.float32)
    b = jax.random.uniform(kb, (c2,), minval=-bound, maxval=bound,
                           dtype=jnp.float32)

    out = jax.block_until_ready(classify_forward(x, w, b, k=k))
    ref = jax.block_until_ready(classify_reference(x, w, b, k=k))

    assert out.shape == (N, c2), out.shape
    np.testing.assert_allclose(np.asarray(out), np.asarray(ref),
                               rtol=1e-5, atol=1e-5)

    print("KERNEL_OK")
</pallas_src>

<mosaic_0001>
module attributes {stable_mosaic.version = 11 : i64} {
  func.func @classify_kernel(%arg0: i32, %arg1: i32, %arg2: memref<1x16x256xf32, #tpu.memory_space<vmem>>, %arg3: memref<16x8xf32, #tpu.memory_space<vmem>>, %arg4: memref<1x8xf32, #tpu.memory_space<vmem>>, %arg5: memref<1x1x8xf32, #tpu.memory_space<vmem>>, %arg6: memref<1x16xf32, #tpu.memory_space<vmem>>) attributes {dimension_semantics = [#tpu.dimension_semantics<parallel>, #tpu.dimension_semantics<arbitrary>], iteration_bounds = array<i64: 2, 1>, scalar_prefetch = 0 : i64, scratch_operands = 1 : i64, tpu.core_type = #tpu.core_type<tc>, window_params = [{transform_indices = @transform_0, window_bounds = array<i64: 1, 16, 256>}, {pipeline_mode = #tpu.pipeline_mode<synchronous>, transform_indices = @transform_1, window_bounds = array<i64: 16, 8>}, {pipeline_mode = #tpu.pipeline_mode<synchronous>, transform_indices = @transform_2, window_bounds = array<i64: 1, 8>}, {transform_indices = @transform_3, window_bounds = array<i64: 1, 1, 8>}]} {
    %c0_i32 = arith.constant 0 : i32
    %0 = arith.cmpi eq, %arg1, %c0_i32 : i32
    %1 = arith.extui %0 : i1 to i32
    %c0_i32_0 = arith.constant 0 : i32
    %2 = arith.cmpi ne, %1, %c0_i32_0 : i32
    scf.if %2 {
      %cst_9 = arith.constant 0.000000e+00 : f32
      %11 = vector.broadcast %cst_9 : f32 to vector<1x16xf32>
      %c0_10 = arith.constant 0 : index
      %c0_11 = arith.constant 0 : index
      %12 = vector.load %arg6[%c0_10, %c0_11] : memref<1x16xf32, #tpu.memory_space<vmem>>, vector<1x16xf32>
      tpu.vector_store %arg6[%c0_10, %c0_11], %11 {strides = array<i32>} : memref<1x16xf32, #tpu.memory_space<vmem>>, vector<1x16xf32>,
    } else {
    }
    %c0 = arith.constant 0 : index
    %c0_1 = arith.constant 0 : index
    %3 = vector.load %arg6[%c0, %c0_1] : memref<1x16xf32, #tpu.memory_space<vmem>>, vector<1x16xf32>
    %c0_2 = arith.constant 0 : index
    %c0_3 = arith.constant 0 : index
    %c0_4 = arith.constant 0 : index
    %4 = vector.load %arg2[%c0_2, %c0_3, %c0_4] : memref<1x16x256xf32, #tpu.memory_space<vmem>>, vector<1x16x256xf32>
    %cst = arith.constant dense<0.000000e+00> : vector<1x16xf32>
    %5 = vector.multi_reduction <add>, %4, %cst [2] : vector<1x16x256xf32> to vector<1x16xf32>
    %6 = arith.addf %3, %5 : vector<1x16xf32>
    %c0_5 = arith.constant 0 : index
    %c0_6 = arith.constant 0 : index
    %7 = vector.load %arg6[%c0_5, %c0_6] : memref<1x16xf32, #tpu.memory_space<vmem>>, vector<1x16xf32>
    tpu.vector_store %arg6[%c0_5, %c0_6], %6 {strides = array<i32>} : memref<1x16xf32, #tpu.memory_space<vmem>>, vector<1x16xf32>,
    %c0_i32_7 = arith.constant 0 : i32
    %8 = arith.cmpi eq, %arg1, %c0_i32_7 : i32
    %9 = arith.extui %8 : i1 to i32
    %c0_i32_8 = arith.constant 0 : i32
    %10 = arith.cmpi ne, %9, %c0_i32_8 : i32
    scf.if %10 {
      %c0_9 = arith.constant 0 : index
      %c0_10 = arith.constant 0 : index
      %11 = vector.load %arg6[%c0_9, %c0_10] : memref<1x16xf32, #tpu.memory_space<vmem>>, vector<1x16xf32>
      %cst_11 = arith.constant 3.906250e-03 : f32
      %12 = vector.broadcast %cst_11 : f32 to vector<1x16xf32>
      %13 = arith.mulf %11, %12 : vector<1x16xf32>
      %c0_12 = arith.constant 0 : index
      %c0_13 = arith.constant 0 : index
      %14 = vector.load %arg3[%c0_12, %c0_13] : memref<16x8xf32, #tpu.memory_space<vmem>>, vector<16x8xf32>
      %cst_14 = arith.constant dense<0.000000e+00> : vector<1x8xf32>
      %15 = tpu.matmul %13, %14, %cst_14 {dimension_numbers = #tpu.dot_dimension_numbers<[1], [0], [0], [1], [0, 0, 1, 1], [], []>} : vector<1x16xf32>, vector<16x8xf32>, vector<1x8xf32> -> vector<1x8xf32>
      %c0_15 = arith.constant 0 : index
      %c0_16 = arith.constant 0 : index
      %16 = vector.load %arg4[%c0_15, %c0_16] : memref<1x8xf32, #tpu.memory_space<vmem>>, vector<1x8xf32>
      %17 = arith.addf %15, %16 : vector<1x8xf32>
      %18 = vector.shape_cast %17 : vector<1x8xf32> to vector<1x1x8xf32>
      %c0_17 = arith.constant 0 : index
      %c0_18 = arith.constant 0 : index
      %c0_19 = arith.constant 0 : index
      %19 = vector.load %arg5[%c0_17, %c0_18, %c0_19] : memref<1x1x8xf32, #tpu.memory_space<vmem>>, vector<1x1x8xf32>
      tpu.vector_store %arg5[%c0_17, %c0_18, %c0_19], %18 {strides = array<i32>} : memref<1x1x8xf32, #tpu.memory_space<vmem>>, vector<1x1x8xf32>,
    } else {
    }
    return
  }
  func.func @transform_0(%arg0: i32, %arg1: i32) -> (i32, i32, i32) {
    %c0_i32 = arith.constant 0 : i32
    %c0_i32_0 = arith.constant 0 : i32
    return %arg0, %c0_i32, %arg1 : i32, i32, i32
  }
  func.func @transform_1(%arg0: i32, %arg1: i32) -> (i32, i32) {
    %c0_i32 = arith.constant 0 : i32
    %c0_i32_0 = arith.constant 0 : i32
    %c0_i32_1 = arith.constant 0 : i32
    return %c0_i32, %c0_i32_0 : i32, i32
  }
  func.func @transform_2(%arg0: i32, %arg1: i32) -> (i32, i32) {
    %c0_i32 = arith.constant 0 : i32
    %c0_i32_0 = arith.constant 0 : i32
    %c0_i32_1 = arith.constant 0 : i32
    return %c0_i32, %c0_i32_0 : i32, i32
  }
  func.func @transform_3(%arg0: i32, %arg1: i32) -> (i32, i32, i32) {
    %c0_i32 = arith.constant 0 : i32
    %c0_i32_0 = arith.constant 0 : i32
    %c0_i32_1 = arith.constant 0 : i32
    return %arg0, %c0_i32, %c0_i32_0 : i32, i32, i32
  }
}

</mosaic_0001>

<llo_original>
// kernel: tpu_custom_call.1
$region0: #{tpu_custom_call.1}
  #allocation0 [shape = 'u32[]', space=smem, size = 0x4, offset = 0x4, fixed_abs, tag = 'smem constant byte address 0x4 - core index']
  #allocation1 [shape = 'u32[72,128]{1,0:T(1,128)}', space=vmem, size = 0x9000, scoped, tag = 'internal scratch']
  #allocation2 [shape = 'f32[1,16]{1,0:T(1,128)}', space=vmem, size = 0x200, scoped, tag = 'scratch operand']
  %s0 = inlined_call_operand.hbm [shape: f32[2,16,256], index: 0, kind: input, shape index: {}]
  %s1 = inlined_call_operand.vmem [shape: f32[16,8], index: 1, kind: input, shape index: {}]
  %s2 = inlined_call_operand.vmem [shape: f32[1,8], index: 2, kind: input, shape index: {}]
  %s3 = inlined_call_operand.hbm [shape: f32[2,1,8], index: 3, kind: output, shape index: {}]
  %s4 = sld [smem:[#allocation0]]
  $region57: #{tpu_custom_call.1} parent=0
    _
  %s6 = ssub.s32 1, %s4
  %s7 = scalar_select 0, %s6, %s4
  $region1: #{tpu_custom_call.1} parent=0
    #allocation3 [shape = 'u8[32768]{0}', space=vmem, size = 0x8000, scoped, tag = 'input window, operand 0']
    #allocation4 [shape = 's32[2]{0}', space=sflag, size = 0x8, scoped, tag = 'scoped memory for tpu_custom_call.1']
    #allocation5 [shape = 's32[2]{0}', space=sflag, size = 0x8, scoped, tag = 'scoped memory for tpu_custom_call.1']
    #allocation6 [shape = 'u8[1024]{0}', space=vmem, size = 0x400, scoped, tag = 'output window, operand 0']
    %8 = vsyncpa [#allocation4], 0
    %s9 = scalar_lea.sflag [#allocation4], 1
    %10 = vsyncpa %s9, 0
    %11 = vsyncpa [#allocation5], 0
    %s12 = scalar_lea.sflag [#allocation5], 1
    %13 = vsyncpa %s12, 0
    loop: start=0, step=1, limit=4
    $region2: #{tpu_custom_call.1} parent=1 // loop_pre_header
      _
    $region3: #{tpu_custom_call.1} parent=1 // loop_header
      %s15 = sphi 0, %s19
      %p16 = scmp.ge.s32.totalorder %s15, 4
      %s22 = sphi 0, %s34
      %s23 = sphi 0, %s30
      %s24 = sphi 0, %s22
      %s25 = sphi 0, %s23
      %s26 = sphi 0, %s24
      %s27 = sphi 0, %s25
      %s39 = sphi 0, %s41
      %s42 = sphi 0, %s39
      %s43 = sphi 0, %s42
      %s59 = sphi 0, %s43
      %s63 = sphi 0, %s63
      %s65 = sphi 0, %s63
      %s66 = sphi 0, %s65
      %s80 = sphi 0, %s66
      %s84 = sphi 0, %s84
      %s86 = sphi 0, %s84
      %s87 = sphi 0, %s86
      %s101 = sphi 0, %s87
      %s107 = sphi 0, %s109
      %s110 = sphi 0, %s107
      %s111 = sphi 0, %s110
      %s127 = sphi 0, %s111
    $region4: #{tpu_custom_call.1} parent=1 // loop_header_branch
      %18 = sbr.rel (%p16) target = $region8
    $region5: #{tpu_custom_call.1} parent=1 // loop_body
      %s20 = ssub.s32 %s15, 1
      %s21 = ssub.s32 %s15, 2
      %s28 = sadd.s32 1, %s23
      %p29 = scmp.ge.s32.totalorder %s28, 1
      %s30 = scalar_select %p29, 0, %s28
      %s31 = sadd.s32 1, %s22
      %s32 = scalar_select %p29, %s31, %s22
      %p33 = scmp.ge.s32.totalorder %s32, 2
      %s34 = scalar_select %p33, 0, %s32
      %s35 = ssub.s32 %s22, %s34
      %s36 = ssub.s32 %s23, %s30
      %s37 = sor.u32 %s35, %s36
      %p38 = scmp.eq.s32.totalorder %s37, 0
      %s40 = sadd.s32 %s39, 1
      %s41 = scalar_select %p38, %s39, %s40
      %p44 = pneg %p38
      %p45 = scmp.eq.s32.totalorder %s15, 1
      %p46 = por %p44, %p45
      %p47 = scmp.ne.s32.totalorder %s39, %s42
      %p48 = scmp.eq.s32.totalorder %s15, 0
      %p49 = por %p47, %p48
      %p50 = scmp.ne.s32.totalorder %s39, %s42
      %p51 = scmp.eq.s32.totalorder %s20, 1
      %p52 = por %p50, %p51
      %p53 = scmp.ne.s32.totalorder %s42, %s43
      %p54 = scmp.eq.s32.totalorder %s20, 0
      %p55 = por %p53, %p54
      %p56 = scmp.ne.s32.totalorder %s42, %s43
      %p57 = scmp.eq.s32.totalorder %s21, 1
      %p58 = por %p56, %p57
      %p60 = scmp.ne.s32.totalorder %s43, %s59
      %p61 = scmp.eq.s32.totalorder %s21, 0
      %p62 = por %p60, %p61
      %s64 = sadd.s32 %s63, 1
      %p67 = scmp.eq.s32.totalorder %s15, 1
      %p68 = scmp.ne.s32.totalorder %s63, %s65
      %p69 = scmp.eq.s32.totalorder %s15, 0
      %p70 = por %p68, %p69
      %p71 = scmp.ne.s32.totalorder %s63, %s65
      %p72 = scmp.eq.s32.totalorder %s20, 1
      %p73 = por %p71, %p72
      %p74 = scmp.ne.s32.totalorder %s65, %s66
      %p75 = scmp.eq.s32.totalorder %s20, 0
      %p76 = por %p74, %p75
      %p77 = scmp.ne.s32.totalorder %s65, %s66
      %p78 = scmp.eq.s32.totalorder %s21, 1
      %p79 = por %p77, %p78
      %p81 = scmp.ne.s32.totalorder %s66, %s80
      %p82 = scmp.eq.s32.totalorder %s21, 0
      %p83 = por %p81, %p82
      %s85 = sadd.s32 %s84, 1
      %p88 = scmp.eq.s32.totalorder %s15, 1
      %p89 = scmp.ne.s32.totalorder %s84, %s86
      %p90 = scmp.eq.s32.totalorder %s15, 0
      %p91 = por %p89, %p90
      %p92 = scmp.ne.s32.totalorder %s84, %s86
      %p93 = scmp.eq.s32.totalorder %s20, 1
      %p94 = por %p92, %p93
      %p95 = scmp.ne.s32.totalorder %s86, %s87
      %p96 = scmp.eq.s32.totalorder %s20, 0
      %p97 = por %p95, %p96
      %p98 = scmp.ne.s32.totalorder %s86, %s87
      %p99 = scmp.eq.s32.totalorder %s21, 1
      %p100 = por %p98, %p99
      %p102 = scmp.ne.s32.totalorder %s87, %s101
      %p103 = scmp.eq.s32.totalorder %s21, 0
      %p104 = por %p102, %p103
      %s105 = ssub.s32 %s22, %s34
      %p106 = scmp.eq.s32.totalorder %s105, 0
      %s108 = sadd.s32 %s107, 1
      %s109 = scalar_select %p106, %s107, %s108
      %p112 = pneg %p106
      %p113 = scmp.eq.s32.totalorder %s15, 1
      %p114 = por %p112, %p113
      %p115 = scmp.ne.s32.totalorder %s107, %s110
      %p116 = scmp.eq.s32.totalorder %s15, 0
      %p117 = por %p115, %p116
      %p118 = scmp.ne.s32.totalorder %s107, %s110
      %p119 = scmp.eq.s32.totalorder %s20, 1
      %p120 = por %p118, %p119
      %p121 = scmp.ne.s32.totalorder %s110, %s111
      %p122 = scmp.eq.s32.totalorder %s20, 0
      %p123 = por %p121, %p122
      %p124 = scmp.ne.s32.totalorder %s110, %s111
      %p125 = scmp.eq.s32.totalorder %s21, 1
      %p126 = por %p124, %p125
      %p128 = scmp.ne.s32.totalorder %s111, %s127
      %p129 = scmp.eq.s32.totalorder %s21, 0
      %p130 = por %p128, %p129
      %p131 = scmp.le.s32.totalorder 1, %s15
      %p132 = scmp.lt.s32.totalorder %s15, 3
      %p133 = pnand %p131, %p132
      %p134 = pneg %p133
      // Predicated region
      $region9: #{tpu_custom_call.1} parent=5 // pred_check
        _
      $region10: #{tpu_custom_call.1} parent=5 // pred_check_branch
        %136 = sbr.rel (%p133) target = $region12
      $region11: #{tpu_custom_call.1} parent=5 // pred_region
        %s137 = ssub.s32 %s15, 1
        // Predicated region
        $region13: #{tpu_custom_call.1} parent=11 // pred_check
          %p138 = pneg %p76
        $region14: #{tpu_custom_call.1} parent=11 // pred_check_branch
          %140 = sbr.rel (%p138) target = $region16
        $region15: #{tpu_custom_call.1} parent=11 // pred_region
          _
        $region16: #{tpu_custom_call.1} parent=11 // pred_fallthru
          _
        // Predicated region
        $region17: #{tpu_custom_call.1} parent=11 // pred_check
          %p141 = pneg %p97
        $region18: #{tpu_custom_call.1} parent=11 // pred_check_branch
          %143 = sbr.rel (%p141) target = $region20
        $region19: #{tpu_custom_call.1} parent=11 // pred_region
          _
        $region20: #{tpu_custom_call.1} parent=11 // pred_fallthru
          _
      $region12: #{tpu_custom_call.1} parent=5 // pred_fallthru
        _
      %p144 = scmp.lt.s32.totalorder %s15, 2
      // Predicated region
      $region21: #{tpu_custom_call.1} parent=5 // pred_check
        %p145 = pneg %p144
      $region22: #{tpu_custom_call.1} parent=5 // pred_check_branch
        %147 = sbr.rel (%p145) target = $region24
      $region23: #{tpu_custom_call.1} parent=5 // pred_region
        // Predicated region
        $region25: #{tpu_custom_call.1} parent=23 // pred_check
          %p148 = pneg %p49
        $region26: #{tpu_custom_call.1} parent=23 // pred_check_branch
          %150 = sbr.rel (%p148) target = $region28
        $region27: #{tpu_custom_call.1} parent=23 // pred_region
          %s151 = sand.u32 %s39, 1
          %s152 = scalar_lea.sflag [#allocation4], %s151
          %s153 = sand.u32 %s39, 1
          %s154 = smul.addr %s153, 32
          %s155 = scalar_lea.vmem [#allocation3], %s154
          %s156 = smul.u32 2, %s23
          %158 = vsyncadd %s152, 0
          %s159 = smul.addr %s22, 4
          %s160 = sadd.s32 %s156, %s159
          %s161 = smul.addr %s160, 8
          %s162 = scalar_lea.hbm %s0, %s161
          %s163 = sshll.u32 %s162, 4
          %s164 = int_to_ptr.hbm [resolvable:$true] %s163
          %s165 = sshll.u32 %s155, 4
          %s166 = int_to_ptr.vmem [resolvable:$true] %s165
          %171 = dma.hbm_to_vmem [thread:$0]  %s164, 512, %s166, %s152, 256, 256, 16
        $region28: #{tpu_custom_call.1} parent=23 // pred_fallthru
          _
      $region24: #{tpu_custom_call.1} parent=5 // pred_fallthru
        _
      %p172 = scmp.le.s32.totalorder 1, %s15
      %p173 = scmp.lt.s32.totalorder %s15, 3
      %p174 = pnand %p172, %p173
      %p175 = pneg %p174
      // Predicated region
      $region29: #{tpu_custom_call.1} parent=5 // pred_check
        _
      $region30: #{tpu_custom_call.1} parent=5 // pred_check_branch
        %177 = sbr.rel (%p174) target = $region32
      $region31: #{tpu_custom_call.1} parent=5 // pred_region
        %s178 = ssub.s32 %s15, 1
        %s179 = sand.u32 %s42, 1
        %s180 = scalar_lea.sflag [#allocation4], %s179
        %s181 = sand.u32 %s42, 1
        %s182 = smul.addr %s181, 32
        %s183 = scalar_lea.vmem [#allocation3], %s182
        // Predicated region
        $region33: #{tpu_custom_call.1} parent=31 // pred_check
          %p184 = pneg %p55
        $region34: #{tpu_custom_call.1} parent=31 // pred_check_branch
          %186 = sbr.rel (%p184) target = $region36
        $region35: #{tpu_custom_call.1} parent=31 // pred_region
          %188 = dma.done %s180, 512
        $region36: #{tpu_custom_call.1} parent=31 // pred_fallthru
          _
        %s189 = sand.u32 %s42, 1
        %s190 = scalar_lea.sflag [#allocation4], %s189
        %s191 = sand.u32 %s42, 1
        %s192 = smul.addr %s191, 32
        %s193 = scalar_lea.vmem [#allocation3], %s192
        %p194 = pneg %p55
        %p195 = pneg %p52
        %p196 = pneg %p76
        %p197 = pneg %p73
        %p198 = pneg %p97
        %p199 = pneg %p94
        %p200 = pneg %p123
        %p201 = pneg %p120
        %s202 = sand.u32 %s110, 1
        %s203 = scalar_lea.sflag [#allocation5], %s202
        %s204 = sand.u32 %s110, 1
        %s205 = scalar_lea.vmem [#allocation6], %s204
        %s206 = smul.u32 2, %s25
        %p207 = scmp.eq.s32.totalorder %s25, 0
        // Predicated region
        $region37: #{tpu_custom_call.1} parent=31 // pred_check
          %p208 = pneg %p207
        $region38: #{tpu_custom_call.1} parent=31 // pred_check_branch
          %210 = sbr.rel (%p208) target = $region40
        $region39: #{tpu_custom_call.1} parent=31 // pred_region
          %vm211 = vcmask 122880
          %212 = vst.msk [vmem:[#allocation2] sm:$0x1] %vm211, 0.0
        $region40: #{tpu_custom_call.1} parent=31 // pred_fallthru
          _
        %v213 = vld [vmem:[#allocation2] sm:$0x1]
        %v214 = vld [vmem:[%s183] sm:$0xff]
        %v215 = vld [vmem:[%s183 + $0x8] sm:$0xff]
        %v216 = vld [vmem:[%s183 + $0x10] sm:$0xff]
        %v217 = vld [vmem:[%s183 + $0x18] sm:$0xff]
        %v218 = vadd.f32 %v214, %v215
        %219 = vadd.xlane.f32.xlu0 %v218
        %v220 = vpop.xlane.xlu0 %219
        %v221 = vadd.f32 %v216, %v217
        %222 = vadd.xlane.f32.xlu0 %v221
        %v223 = vpop.xlane.xlu0 %222
        %v226 = vperm.slane %v220, 0
        %v227 = vperm.slane %v220, 1
        %v228 = vperm.slane %v220, 2
        %v229 = vperm.slane %v220, 3
        %v230 = vperm.slane %v220, 4
        %v231 = vperm.slane %v220, 5
        %v232 = vperm.slane %v220, 6
        %v233 = vperm.slane %v220, 7
        %v234 = vperm.slane %v223, 0
        %v235 = vperm.slane %v223, 1
        %v236 = vperm.slane %v223, 2
        %v237 = vperm.slane %v223, 3
        %v238 = vperm.slane %v223, 4
        %v239 = vperm.slane %v223, 5
        %v240 = vperm.slane %v223, 6
        %v241 = vperm.slane %v223, 7
        %242 = vst [vmem:[#allocation1] ss:$9 sm:$0xff] %v226
        %s243 = scalar_lea.vmem [#allocation1], 1
        %244 = vst [vmem:[%s243] ss:$9 sm:$0xff] %v227
        %s245 = scalar_lea.vmem [#allocation1], 2
        %246 = vst [vmem:[%s245] ss:$9 sm:$0xff] %v228
        %s247 = scalar_lea.vmem [#allocation1], 3
        %248 = vst [vmem:[%s247] ss:$9 sm:$0xff] %v229
        %s249 = scalar_lea.vmem [#allocation1], 4
        %250 = vst [vmem:[%s249] ss:$9 sm:$0xff] %v230
        %s251 = scalar_lea.vmem [#allocation1], 5
        %252 = vst [vmem:[%s251] ss:$9 sm:$0xff] %v231
        %s253 = scalar_lea.vmem [#allocation1], 6
        %254 = vst [vmem:[%s253] ss:$9 sm:$0xff] %v232
        %s255 = scalar_lea.vmem [#allocation1], 7
        %256 = vst [vmem:[%s255] ss:$9 sm:$0xff] %v233
        %v257 = vld [vmem:[#allocation1] sm:$0xff]
        %258 = vst [vmem:[#allocation1] ss:$9 sm:$0xff] %v234
        %259 = vst [vmem:[%s243] ss:$9 sm:$0xff] %v235
        %260 = vst [vmem:[%s245] ss:$9 sm:$0xff] %v236
        %261 = vst [vmem:[%s247] ss:$9 sm:$0xff] %v237
        %262 = vst [vmem:[%s249] ss:$9 sm:$0xff] %v238
        %263 = vst [vmem:[%s251] ss:$9 sm:$0xff] %v239
        %264 = vst [vmem:[%s253] ss:$9 sm:$0xff] %v240
        %265 = vst [vmem:[%s255] ss:$9 sm:$0xff] %v241
        %v266 = vld [vmem:[#allocation1] sm:$0xff]
        %267 = vset.pattern.permute.xlu0 0
        %268 = vperm.xlu0 %267, %v257
        %v269 = vpop.permute.xlu0 %268
        %270 = vset.pattern.permute.xlu0 0
        %271 = vperm.xlu0 %270, %v266
        %v272 = vpop.permute.xlu0 %271
        %v273 = vlaneseq
        %v274 = vand.u32 %v273, 127
        %v275 = vperm.slane %v269, %v274
        %v276 = vadd.s32 %v274, 4294967288
        %v277 = vperm.slane %v272, %v276
        %vm278 = vcmask 130112
        %v279 = vsel %vm278, %v277, %v275
        %v281 = vadd.f32 %v213, %v279
        %vm282 = vcmask 122880
        %283 = vst.msk [vmem:[#allocation2] sm:$0x1] %vm282, %v281
        // Predicated region
        $region41: #{tpu_custom_call.1} parent=31 // pred_check
          %p284 = pneg %p207
        $region42: #{tpu_custom_call.1} parent=31 // pred_check_branch
          %286 = sbr.rel (%p284) target = $region44
        $region43: #{tpu_custom_call.1} parent=31 // pred_region
          %v287 = vld [vmem:[#allocation2] sm:$0x1]
          %v288 = vmul.f32 %v287, 0.00390625
          %v289 = vld [vmem:[%s1] sm:$0xff]
          %v290 = vld [vmem:[%s1 + $0x8] sm:$0xff]
          %v291 = vld [vmem:[%s2] sm:$0x1]
          %vm292 = vcmask 130048
          %v294 = vsel %vm292, %v288, 0
          %296 = vmatpush.msra.mxu0 0.0
          %297 = vmatpush.msra.mxu0 0.0
          %298 = vmatpush.msra.mxu0 0.0
          %299 = vmatpush.msra.mxu0 0.0
          %300 = vmatpush.msra.mxu0 0.0
          %301 = vmatpush.msra.mxu0 0.0
          %302 = vmatpush.msra.mxu0 0.0
          %303 = vmatpush.msra.mxu0 0.0
          %304 = vmatpush.msra.mxu0 0.0
          %305 = vmatpush.msra.mxu0 0.0
          %306 = vmatpush.msra.mxu0 0.0
          %307 = vmatpush.msra.mxu0 0.0
          %308 = vmatpush.msra.mxu0 0.0
          %309 = vmatpush.msra.mxu0 0.0
          %310 = vmatpush.msra.mxu0 %v290
          %311 = vmatpush.msra.mxu0 %v289
          %312 = vmatmul.f32.gmra.mxu0 %v294
          %v313 = vpop.f32.mrf.mxu0
          %v314 = vadd.f32 %v291, %v313
          %315 = vdwg.mxu0
          %vm316 = vcmask 57344
          %317 = vst.msk [vmem:[%s205] sm:$0x1] %vm316, %v314
        $region44: #{tpu_custom_call.1} parent=31 // pred_fallthru
          _
        %s318 = sand.u32 %s110, 1
        %s319 = scalar_lea.sflag [#allocation5], %s318
        %s320 = sand.u32 %s110, 1
        %s321 = scalar_lea.vmem [#allocation6], %s320
        // Predicated region
        $region45: #{tpu_custom_call.1} parent=31 // pred_check
          %p322 = pneg %p120
        $region46: #{tpu_custom_call.1} parent=31 // pred_check_branch
          %324 = sbr.rel (%p322) target = $region48
        $region47: #{tpu_custom_call.1} parent=31 // pred_region
          %326 = vsyncadd %s319, 0
          %s327 = scalar_lea.hbm %s3, %s24
          %s329 = sshll.u32 %s321, 4
          %s330 = int_to_ptr.vmem [resolvable:$true] %s329
          %s331 = sshll.u32 %s327, 4
          %s332 = int_to_ptr.hbm [resolvable:$true] %s331
          %334 = dma.vmem_to_hbm [thread:$0]  %s330, 16, %s332, %s319
        $region48: #{tpu_custom_call.1} parent=31 // pred_fallthru
          _
      $region32: #{tpu_custom_call.1} parent=5 // pred_fallthru
        _
      %p335 = scmp.le.s32.totalorder 2, %s15
      // Predicated region
      $region49: #{tpu_custom_call.1} parent=5 // pred_check
        %p336 = pneg %p335
      $region50: #{tpu_custom_call.1} parent=5 // pred_check_branch
        %338 = sbr.rel (%p336) target = $region52
      $region51: #{tpu_custom_call.1} parent=5 // pred_region
        %s339 = ssub.s32 %s15, 2
        // Predicated region
        $region53: #{tpu_custom_call.1} parent=51 // pred_check
          %p340 = pneg %p126
        $region54: #{tpu_custom_call.1} parent=51 // pred_check_branch
          %342 = sbr.rel (%p340) target = $region56
        $region55: #{tpu_custom_call.1} parent=51 // pred_region
          %s343 = sand.u32 %s111, 1
          %s344 = scalar_lea.sflag [#allocation5], %s343
          %s345 = sand.u32 %s111, 1
          %s346 = scalar_lea.vmem [#allocation6], %s345
          %348 = dma.done %s344, 16
        $region56: #{tpu_custom_call.1} parent=51 // pred_fallthru
          _
      $region52: #{tpu_custom_call.1} parent=5 // pred_fallthru
        _
    $region6: #{tpu_custom_call.1} parent=1 // loop_footer
      %s19 = sadd.s32 1, %s15
    $region7: #{tpu_custom_call.1} parent=1 // loop_footer_branch
      %14 = sbr.rel target = $region3
    $region8: #{tpu_custom_call.1} parent=1 // loop_exit
      _
    %349 = vsyncpa [#allocation4], 1
    %s350 = scalar_lea.sflag [#allocation4], 1
    %351 = vsyncpa %s350, 1
    %352 = vsyncpa [#allocation5], 1
    %s353 = scalar_lea.sflag [#allocation5], 1
    %354 = vsyncpa %s353, 1

</llo_original>
